<compile_context>
chip_gen: v7x
topology: tpu7x:2x2x1
jax: 0.10.0
libtpu: 0.0.40
codegen_flags: <defaults>
</compile_context>

<pallas_src>
import functools

import jax
import jax.numpy as jnp
from jax.experimental import pallas as pl
from jax.experimental.pallas import tpu as pltpu


def _round_up(a, b):
    return (a + b - 1) // b * b


def _concat_squash_kernel(x_ref, w_ref, p_ref, o_ref, *, act, compute_dtype,
                          epilogue_dtype):
    # x_ref: (TM, dim_in)   activations in native dtype (cast here on the VPU,
    #                       hidden under DMA/MXU -> no wrapper cast pass).
    # w_ref: (dim_in, dim_out) weight; constant index_map -> resident in VMEM.
    # p_ref: (2, dim_out) f32 rows [gate ; c] precomputed in the wrapper:
    #        gate = sigmoid(t*Wg + bg),  c = b*gate + t*Wb.
    # o_ref: (TM, dim_out) output tile.
    x = x_ref[...].astype(compute_dtype)
    h = jnp.dot(x, w_ref[...], preferred_element_type=jnp.float32)

    p = p_ref[...]
    gate = p[0:1, :]                    # (1, dim_out), broadcasts over rows
    c = p[1:2, :]

    out = h * gate + c                  # == (x@W + b)*gate + t*Wb   (f32)
    if act == "tanh":
        # epilogue_dtype=bf16 runs the tanh ~2x faster on v6e/v7x; f32 default.
        out = jnp.tanh(out.astype(epilogue_dtype))
    elif act == "relu":
        out = jnp.maximum(out, 0.0)
    # act is None -> identity
    o_ref[...] = out.astype(o_ref.dtype)


def concat_squash_linear(t, x, params, act=None, *,
                         compute_dtype=jnp.float32,
                         out_dtype=jnp.float32,
                         epilogue_dtype=jnp.float32,
                         tile_m=1024):
    """Mirrors ConcatSquashLinear.forward; returns (t, out).

    compute_dtype=bf16 casts the matmul operands (f32 MXU accumulation) — an
    intentional precision trade-off vs the f32 PyTorch module.  out_dtype=bf16
    halves the output HBM stream when the consumer accepts it.
    """
    B, dim_in = x.shape
    W, b, wg, bg, wb = params           # W: (dim_in, dim_out); rest: (1, dim_out)
    dim_out = W.shape[1]

    compute_dtype = jnp.dtype(compute_dtype)
    out_dtype = jnp.dtype(out_dtype)
    epilogue_dtype = jnp.dtype(epilogue_dtype)

    # ---- hoist the tiny hyper-net math out of the kernel --------------------
    t32 = jnp.asarray(t, jnp.float32).reshape(1, 1)
    gate = jax.nn.sigmoid(t32 * wg.astype(jnp.float32) + bg.astype(jnp.float32))
    c = b.astype(jnp.float32) * gate + t32 * wb.astype(jnp.float32)
    packed = jnp.concatenate([gate, c], axis=0)          # (2, dim_out) f32 slab

    w_c = W.astype(compute_dtype)       # tiny one-off cast; W stays resident

    # ---- 1-D batch grid: TN == full dim_out, TM sized against v7x's 64 MiB
    #      physical VMEM (tightest generation); double-buffered x/out tiles. --
    x_it = jnp.dtype(x.dtype).itemsize
    per_row = 2 * dim_in * x_it + 2 * dim_out * out_dtype.itemsize
    fixed = 2 * dim_in * dim_out * compute_dtype.itemsize + 2 * 2 * dim_out * 4
    budget = 40 << 20
    TM = min(tile_m, _round_up(B, 8))
    while TM > 8 and fixed + TM * per_row > budget:
        TM = max(8, _round_up(TM // 2, 8))
    # v7x has 2 TensorCores: keep >= 2 batch tiles when B is sizable so the
    # "parallel" batch axis can be megacore-sharded (no-op cost on v5e/v6e).
    if B >= 256 and pl.cdiv(B, TM) < 2:
        TM = max(8, _round_up(pl.cdiv(B, 2), 8))
    n_i = pl.cdiv(B, TM)

    vmem_limit = int(min(max(fixed + TM * per_row + (4 << 20), 16 << 20), 48 << 20))

    cost = pl.CostEstimate(
        flops=2 * B * dim_in * dim_out + 2 * B * dim_out,
        transcendentals=B * dim_out if act == "tanh" else 0,
        bytes_accessed=(x.size * x_it
                        + w_c.size * compute_dtype.itemsize
                        + packed.size * 4
                        + B * dim_out * out_dtype.itemsize),
    )

    kernel = functools.partial(_concat_squash_kernel, act=act,
                               compute_dtype=compute_dtype,
                               epilogue_dtype=epilogue_dtype)

    out = pl.pallas_call(
        kernel,
        out_shape=jax.ShapeDtypeStruct((B, dim_out), out_dtype),
        grid=(n_i,),
        in_specs=[
            pl.BlockSpec((TM, dim_in), lambda i: (i, 0)),        # x tile (native dtype)
            pl.BlockSpec((dim_in, dim_out), lambda i: (0, 0)),   # full W, resident
            pl.BlockSpec((2, dim_out), lambda i: (0, 0)),        # [gate ; c]
        ],
        out_specs=pl.BlockSpec((TM, dim_out), lambda i: (i, 0)),
        compiler_params=pltpu.CompilerParams(
            dimension_semantics=("parallel",),
            vmem_limit_bytes=vmem_limit),
        cost_estimate=cost,
    )(x, w_c, packed)

    return t, out


def init_params(key, dim_in, dim_out):
    """Synthetic params matching nn.Linear shapes.

    PyTorch stores _layer.weight as (dim_out, dim_in); we keep the transposed
    (dim_in, dim_out) layout so the kernel does x @ W directly on the MXU.
    _hyper_gate: Linear(1, dim_out) with bias; _hyper_bias: Linear(1, dim_out), no bias.
    """
    k1, k2, k3, k4, k5 = jax.random.split(key, 5)
    bound = 1.0 / jnp.sqrt(dim_in)
    W = jax.random.uniform(k1, (dim_in, dim_out), jnp.float32, -bound, bound)
    b = jax.random.uniform(k2, (1, dim_out), jnp.float32, -bound, bound)
    wg = jax.random.uniform(k3, (1, dim_out), jnp.float32, -1.0, 1.0)
    bg = jax.random.uniform(k4, (1, dim_out), jnp.float32, -1.0, 1.0)
    wb = jax.random.uniform(k5, (1, dim_out), jnp.float32, -1.0, 1.0)
    return W, b, wg, bg, wb


def reference(t, x, params, act=None, compute_dtype=jnp.float32):
    W, b, wg, bg, wb = params
    h = jnp.dot(x.astype(compute_dtype), W.astype(compute_dtype),
                preferred_element_type=jnp.float32) + b
    gate = jax.nn.sigmoid(t * wg + bg)
    hb = t * wb
    out = h * gate + hb
    if act == "tanh":
        out = jnp.tanh(out)
    elif act == "relu":
        out = jnp.maximum(out, 0.0)
    return out


if __name__ == "__main__":
    key = jax.random.PRNGKey(0)
    k_p1, k_p2, k_p3, k_x1, k_x2, k_x3, k_t = jax.random.split(key, 7)
    t = jax.random.uniform(k_t, (), jnp.float32)   # scalar time

    # Case 1: tiny module-like shapes, pure f32 path, tanh activation.
    b1, din1, dout1 = 8, 32, 64
    params1 = init_params(k_p1, din1, dout1)
    x1 = jax.random.normal(k_x1, (b1, din1), jnp.float32)
    t_out, out1 = concat_squash_linear(t, x1, params1, act="tanh",
                                       compute_dtype=jnp.float32)
    out1 = jax.block_until_ready(out1)
    ref1 = reference(t, x1, params1, act="tanh", compute_dtype=jnp.float32)
    assert out1.shape == (b1, dout1)
    assert jnp.allclose(out1, ref1, atol=2e-5, rtol=2e-5), "f32 path mismatch"

    # Case 2: lane-dense shapes, bf16 matmul operands (f32 accumulate/epilogue).
    b2, din2, dout2 = 64, 128, 256
    params2 = init_params(k_p2, din2, dout2)
    x2 = jax.random.normal(k_x2, (b2, din2), jnp.float32)
    _, out2 = concat_squash_linear(t, x2, params2, act="relu",
                                   compute_dtype=jnp.bfloat16)
    out2 = jax.block_until_ready(out2)
    ref2 = reference(t, x2, params2, act="relu", compute_dtype=jnp.bfloat16)
    assert out2.shape == (b2, dout2)
    assert jnp.allclose(out2, ref2, atol=1e-4, rtol=1e-4), "bf16 path mismatch"
    ref2_f32 = reference(t, x2, params2, act="relu", compute_dtype=jnp.float32)
    assert jnp.allclose(out2, ref2_f32, atol=5e-2, rtol=5e-2), "bf16 drifted too far"

    # Case 3: unaligned shapes, act=None — exercises Pallas boundary masking
    # (no wrapper padding, no post-call slicing).
    b3, din3, dout3 = 10, 17, 33
    params3 = init_params(k_p3, din3, dout3)
    x3 = jax.random.normal(k_x3, (b3, din3), jnp.float32)
    _, out3 = concat_squash_linear(t, x3, params3, act=None,
                                   compute_dtype=jnp.float32)
    out3 = jax.block_until_ready(out3)
    ref3 = reference(t, x3, params3, act=None, compute_dtype=jnp.float32)
    assert out3.shape == (b3, dout3)
    assert jnp.allclose(out3, ref3, atol=2e-5, rtol=2e-5), "edge-mask path mismatch"

    print("KERNEL_OK")
</pallas_src>

<mosaic_0001>
module attributes {stable_mosaic.version = 11 : i64} {
  func.func @_concat_squash_kernel(%arg0: i32, %arg1: memref<8x32xf32, #tpu.memory_space<vmem>>, %arg2: memref<32x64xf32, #tpu.memory_space<vmem>>, %arg3: memref<2x64xf32, #tpu.memory_space<vmem>>, %arg4: memref<8x64xf32, #tpu.memory_space<vmem>>) attributes {dimension_semantics = [#tpu.dimension_semantics<parallel>], iteration_bounds = array<i64: 1>, scalar_prefetch = 0 : i64, scratch_operands = 0 : i64, tpu.core_type = #tpu.core_type<tc>, window_params = [{transform_indices = @transform_0, window_bounds = array<i64: 8, 32>}, {pipeline_mode = #tpu.pipeline_mode<synchronous>, transform_indices = @transform_1, window_bounds = array<i64: 32, 64>}, {pipeline_mode = #tpu.pipeline_mode<synchronous>, transform_indices = @transform_2, window_bounds = array<i64: 2, 64>}, {transform_indices = @transform_3, window_bounds = array<i64: 8, 64>}]} {
    %c0 = arith.constant 0 : index
    %c0_0 = arith.constant 0 : index
    %0 = vector.load %arg1[%c0, %c0_0] : memref<8x32xf32, #tpu.memory_space<vmem>>, vector<8x32xf32>
    %c0_1 = arith.constant 0 : index
    %c0_2 = arith.constant 0 : index
    %1 = vector.load %arg2[%c0_1, %c0_2] : memref<32x64xf32, #tpu.memory_space<vmem>>, vector<32x64xf32>
    %cst = arith.constant dense<0.000000e+00> : vector<8x64xf32>
    %2 = tpu.matmul %0, %1, %cst {dimension_numbers = #tpu.dot_dimension_numbers<[1], [0], [0], [1], [0, 0, 1, 1], [], []>} : vector<8x32xf32>, vector<32x64xf32>, vector<8x64xf32> -> vector<8x64xf32>
    %c0_3 = arith.constant 0 : index
    %c0_4 = arith.constant 0 : index
    %3 = vector.load %arg3[%c0_3, %c0_4] : memref<2x64xf32, #tpu.memory_space<vmem>>, vector<2x64xf32>
    %4 = vector.extract_strided_slice %3 {offsets = [0, 0], sizes = [1, 64], strides = [1, 1]} : vector<2x64xf32> to vector<1x64xf32>
    %5 = vector.extract_strided_slice %3 {offsets = [1, 0], sizes = [1, 64], strides = [1, 1]} : vector<2x64xf32> to vector<1x64xf32>
    %6 = vector.broadcast %4 : vector<1x64xf32> to vector<8x64xf32>
    %7 = arith.mulf %2, %6 : vector<8x64xf32>
    %8 = vector.broadcast %5 : vector<1x64xf32> to vector<8x64xf32>
    %9 = arith.addf %7, %8 : vector<8x64xf32>
    %10 = math.tanh %9 : vector<8x64xf32>
    %c0_5 = arith.constant 0 : index
    %c0_6 = arith.constant 0 : index
    %11 = vector.load %arg4[%c0_5, %c0_6] : memref<8x64xf32, #tpu.memory_space<vmem>>, vector<8x64xf32>
    tpu.vector_store %arg4[%c0_5, %c0_6], %10 {strides = array<i32>} : memref<8x64xf32, #tpu.memory_space<vmem>>, vector<8x64xf32>,
    return
  }
  func.func @transform_0(%arg0: i32) -> (i32, i32) {
    %c0_i32 = arith.constant 0 : i32
    %c0_i32_0 = arith.constant 0 : i32
    return %arg0, %c0_i32 : i32, i32
  }
  func.func @transform_1(%arg0: i32) -> (i32, i32) {
    %c0_i32 = arith.constant 0 : i32
    %c0_i32_0 = arith.constant 0 : i32
    %c0_i32_1 = arith.constant 0 : i32
    return %c0_i32, %c0_i32_0 : i32, i32
  }
  func.func @transform_2(%arg0: i32) -> (i32, i32) {
    %c0_i32 = arith.constant 0 : i32
    %c0_i32_0 = arith.constant 0 : i32
    %c0_i32_1 = arith.constant 0 : i32
    return %c0_i32, %c0_i32_0 : i32, i32
  }
  func.func @transform_3(%arg0: i32) -> (i32, i32) {
    %c0_i32 = arith.constant 0 : i32
    %c0_i32_0 = arith.constant 0 : i32
    return %arg0, %c0_i32 : i32, i32
  }
}

</mosaic_0001>

<llo_original>
// kernel: tpu_custom_call.1
$region0: #{tpu_custom_call.1}
  #allocation0 [shape = 'u32[]', space=smem, size = 0x4, offset = 0x4, fixed_abs, tag = 'smem constant byte address 0x4 - core index']
  #allocation1 [shape = 'u32[144,128]{1,0:T(1,128)}', space=vmem, size = 0x12000, scoped, tag = 'internal scratch']
  %s0 = inlined_call_operand.hbm [shape: f32[8,32], index: 0, kind: input, shape index: {}]
  %s1 = inlined_call_operand.hbm [shape: f32[32,64], index: 1, kind: input, shape index: {}]
  %s2 = inlined_call_operand.vmem [shape: f32[2,64], index: 2, kind: input, shape index: {}]
  %s3 = inlined_call_operand.hbm [shape: f32[8,64], index: 3, kind: output, shape index: {}]
  %s4 = sld [smem:[#allocation0]]
  $region30: #{tpu_custom_call.1} parent=0
    _
  %s6 = ssub.s32 1, %s4
  %s7 = scalar_select 0, %s6, %s4
  $region1: #{tpu_custom_call.1} parent=0
    #allocation2 [shape = 'u8[4096]{0}', space=vmem, size = 0x1000, scoped, tag = 'input window, operand 0, single buffered']
    #allocation3 [shape = 's32[1]{0}', space=sflag, size = 0x4, scoped, tag = 'scoped memory for tpu_custom_call.1']
    #allocation4 [shape = 's32[1]{0}', space=sflag, size = 0x4, scoped, tag = 'scoped memory for tpu_custom_call.1']
    #allocation5 [shape = 'u8[16384]{0}', space=vmem, size = 0x4000, scoped, tag = 'input window, operand 1, single buffered']
    #allocation6 [shape = 's32[1]{0}', space=sflag, size = 0x4, scoped, tag = 'scoped memory for tpu_custom_call.1']
    #allocation7 [shape = 'u8[4096]{0}', space=vmem, size = 0x1000, scoped, tag = 'output window, operand 0, single buffered']
    %8 = vsyncpa [#allocation3], 0
    %9 = vsyncpa [#allocation6], 0
    %10 = vsyncpa [#allocation4], 0
    // Predicated region
    $region2: #{tpu_custom_call.1} parent=1 // pred_check
      _
    $region3: #{tpu_custom_call.1} parent=1 // pred_check_branch
      %12 = sbr.rel (0) target = $region5
    $region4: #{tpu_custom_call.1} parent=1 // pred_region
      %s14 = ssub.s32 128, 128
      %15 = vsyncadd [#allocation3], %s14
      %s17 = sshll.u32 [#allocation2], 4
      %s18 = int_to_ptr.vmem [resolvable:$true] %s17
      %20 = dma.hbm_to_vmem [thread:$0]  %s0, 128, %s18, [#allocation3]
    $region5: #{tpu_custom_call.1} parent=1 // pred_fallthru
      _
    // Predicated region
    $region6: #{tpu_custom_call.1} parent=1 // pred_check
      _
    $region7: #{tpu_custom_call.1} parent=1 // pred_check_branch
      %22 = sbr.rel (0) target = $region9
    $region8: #{tpu_custom_call.1} parent=1 // pred_region
      %s24 = ssub.s32 512, 512
      %25 = vsyncadd [#allocation6], %s24
      %s26 = sshll.u32 [#allocation5], 4
      %s27 = int_to_ptr.vmem [resolvable:$true] %s26
      %32 = dma.hbm_to_vmem [thread:$0]  %s1, 512, %s27, [#allocation6], 128, 128, 8
    $region9: #{tpu_custom_call.1} parent=1 // pred_fallthru
      _
    // Predicated region
    $region10: #{tpu_custom_call.1} parent=1 // pred_check
      _
    $region11: #{tpu_custom_call.1} parent=1 // pred_check_branch
      %34 = sbr.rel (0) target = $region13
    $region12: #{tpu_custom_call.1} parent=1 // pred_region
      _
    $region13: #{tpu_custom_call.1} parent=1 // pred_fallthru
      _
    // Predicated region
    $region14: #{tpu_custom_call.1} parent=1 // pred_check
      _
    $region15: #{tpu_custom_call.1} parent=1 // pred_check_branch
      %36 = sbr.rel (0) target = $region17
    $region16: #{tpu_custom_call.1} parent=1 // pred_region
      %37 = dma.done [#allocation3], 128
    $region17: #{tpu_custom_call.1} parent=1 // pred_fallthru
      _
    // Predicated region
    $region18: #{tpu_custom_call.1} parent=1 // pred_check
      _
    $region19: #{tpu_custom_call.1} parent=1 // pred_check_branch
      %39 = sbr.rel (0) target = $region21
    $region20: #{tpu_custom_call.1} parent=1 // pred_region
      %40 = dma.done [#allocation6], 512
    $region21: #{tpu_custom_call.1} parent=1 // pred_fallthru
      _
    %v41 = vld [vmem:[#allocation2] sm:$0xff]
    %v42 = vld [vmem:[#allocation5] sm:$0xff]
    %v43 = vld [vmem:[#allocation5 + $0x8] sm:$0xff]
    %v44 = vld [vmem:[#allocation5 + $0x10] sm:$0xff]
    %v45 = vld [vmem:[#allocation5 + $0x18] sm:$0xff]
    %vm46 = vcmask 261120
    %v48 = vsel %vm46, %v41, 0
    %50 = vmatprep.subr.mxu0 0.0
    %51 = vmatpush1.msra.mxu0 %v42
    %52 = vmatprep.subr.mxu0 0.0
    %53 = vmatpush1.msra.mxu0 %v43
    %54 = vmatprep.subr.mxu0 0.0
    %55 = vmatpush1.msra.mxu0 %v44
    %56 = vmatprep.subr.mxu0 0.0
    %57 = vmatpush1.msra.mxu0 %v45
    %58 = vmatprep.subr.mxu0 0.0
    %59 = vmatpush1.msra.mxu0 0.0
    %60 = vmatprep.subr.mxu0 0.0
    %61 = vmatpush1.msra.mxu0 0.0
    %62 = vmatprep.subr.mxu0 0.0
    %63 = vmatpush1.msra.mxu0 0.0
    %64 = vmatprep.subr.mxu0 0.0
    %65 = vmatpush1.msra.mxu0 0.0
    %66 = vmatprep.subr.mxu0 0.0
    %67 = vmatpush1.msra.mxu0 0.0
    %68 = vmatprep.subr.mxu0 0.0
    %69 = vmatpush1.msra.mxu0 0.0
    %70 = vmatprep.subr.mxu0 0.0
    %71 = vmatpush1.msra.mxu0 0.0
    %72 = vmatprep.subr.mxu0 0.0
    %73 = vmatpush1.msra.mxu0 0.0
    %74 = vmatprep.subr.mxu0 0.0
    %75 = vmatpush1.msra.mxu0 0.0
    %76 = vmatprep.subr.mxu0 0.0
    %77 = vmatpush1.msra.mxu0 0.0
    %78 = vmatprep.subr.mxu0 0.0
    %79 = vmatpush1.msra.mxu0 0.0
    %80 = vmatprep.subr.mxu0 0.0
    %81 = vmatpush1.msra.mxu0 0.0
    %82 = vmatprep.subr.mxu0 0.0
    %83 = vmatpush1.msra.mxu0 0.0
    %84 = vmatprep.subr.mxu0 0.0
    %85 = vmatpush1.msra.mxu0 0.0
    %86 = vmatprep.subr.mxu0 0.0
    %87 = vmatpush1.msra.mxu0 0.0
    %88 = vmatprep.subr.mxu0 0.0
    %89 = vmatpush1.msra.mxu0 0.0
    %90 = vmatprep.subr.mxu0 0.0
    %91 = vmatpush1.msra.mxu0 0.0
    %92 = vmatprep.subr.mxu0 0.0
    %93 = vmatpush1.msra.mxu0 0.0
    %94 = vmatprep.subr.mxu0 0.0
    %95 = vmatpush1.msra.mxu0 0.0
    %96 = vmatprep.subr.mxu0 0.0
    %97 = vmatpush1.msra.mxu0 0.0
    %98 = vmatprep.subr.mxu0 0.0
    %99 = vmatpush1.msra.mxu0 0.0
    %100 = vmatprep.subr.mxu0 0.0
    %101 = vmatpush1.msra.mxu0 0.0
    %102 = vmatprep.subr.mxu0 0.0
    %103 = vmatpush1.msra.mxu0 0.0
    %104 = vmatprep.subr.mxu0 0.0
    %105 = vmatpush1.msra.mxu0 0.0
    %106 = vmatprep.subr.mxu0 0.0
    %107 = vmatpush1.msra.mxu0 0.0
    %108 = vmatprep.subr.mxu0 0.0
    %109 = vmatpush1.msra.mxu0 0.0
    %110 = vmatprep.subr.mxu0 0.0
    %111 = vmatpush1.msra.mxu0 0.0
    %112 = vmatprep.subr.mxu0 0.0
    %113 = vmatpush1.msra.mxu0 0.0
    %114 = vmatprep.mubr.f32.mxu0 0.0
    %115 = vmatmul.mubr.f32.gmra.mrb[0].mxu0 %v48
    %v116 = vpop.f32.mrb[0].mxu0
    %v117 = vadd.f32 0.0, %v116
    %v118 = vpop.f32.mrb[0].mxu0
    %119 = vdwg.mxu0
    %v120 = vld [vmem:[%s2] sm:$0x3]
    %v121 = vlaneseq
    %v122 = vshrl.u32 %v121, 7
    %v123 = vsub.s32 0, %v122
    %v124 = vrot.slane %v120, %v123
    %v125 = vmul.f32 %v117, %v124
    %v126 = vlaneseq
    %v127 = vshrl.u32 %v126, 7
    %v128 = vsub.s32 1, %v127
    %v129 = vrot.slane %v120, %v128
    %v130 = vadd.f32 %v125, %v129
    %v131 = vtanh.pop %v130
    %vm132 = vcmask 523264
    %133 = vst.msk [vmem:[#allocation7] sm:$0xff] %vm132, %v131
    // Predicated region
    $region22: #{tpu_custom_call.1} parent=1 // pred_check
      _
    $region23: #{tpu_custom_call.1} parent=1 // pred_check_branch
      %135 = sbr.rel (0) target = $region25
    $region24: #{tpu_custom_call.1} parent=1 // pred_region
      %s137 = ssub.s32 128, 128
      %138 = vsyncadd [#allocation4], %s137
      %s140 = sshll.u32 [#allocation7], 4
      %s141 = int_to_ptr.vmem [resolvable:$true] %s140
      %143 = dma.vmem_to_hbm [thread:$0]  %s141, 128, %s3, [#allocation4]
    $region25: #{tpu_custom_call.1} parent=1 // pred_fallthru
      _
    // Predicated region
    $region26: #{tpu_custom_call.1} parent=1 // pred_check
      _
    $region27: #{tpu_custom_call.1} parent=1 // pred_check_branch
      %145 = sbr.rel (0) target = $region29
    $region28: #{tpu_custom_call.1} parent=1 // pred_region
      %146 = dma.done [#allocation4], 128
    $region29: #{tpu_custom_call.1} parent=1 // pred_fallthru
      _
    %147 = vsyncpa [#allocation3], 1
    %148 = vsyncpa [#allocation6], 1
    %149 = vsyncpa [#allocation4], 1

</llo_original>
